<compile_context>
chip_gen: v5e
topology: v5e:2x2
jax: 0.10.0
libtpu: 0.0.40
codegen_flags: <defaults>
</compile_context>

<pallas_src>
import jax
import jax.numpy as jnp
from jax import lax
from jax.experimental import pallas as pl
from jax.experimental.pallas import tpu as pltpu


# ----------------------------------------------------------------------------- kernels

def _proto_kernel_single_k(task_ref, x_ref, w_ref, o_ref):
    # x_ref: (B, feat_dim) resident, w_ref: (tn, feat_dim) tile of the selected
    # head. Single K step: write straight to the output, no accumulator.
    o_ref[...] = lax.dot_general(
        x_ref[...], w_ref[...],
        dimension_numbers=(((1,), (1,)), ((), ())),  # contract last dim of both
        preferred_element_type=jnp.float32,
    ).astype(o_ref.dtype)


def _make_multi_k_kernel(tk: int):
    def kernel(task_ref, x_ref, w_ref, o_ref, acc_ref):
        # x_ref: (B, feat_dim) resident; w_ref: (tn, tk) tile of selected head.
        k = pl.program_id(1)

        @pl.when(k == 0)
        def _init():
            acc_ref[...] = jnp.zeros_like(acc_ref)

        start = pl.multiple_of(k * tk, 128)  # tk is a 128-multiple divisor
        acc_ref[...] += lax.dot_general(
            x_ref[:, pl.ds(start, tk)], w_ref[...],
            dimension_numbers=(((1,), (1,)), ((), ())),
            preferred_element_type=jnp.float32,
        )

        @pl.when(k == pl.num_programs(1) - 1)
        def _finalize():
            o_ref[...] = acc_ref[...].astype(o_ref.dtype)

    return kernel


# ----------------------------------------------------------------------------- tiling

def _select_tn(n_classes: int, tn_pref: int) -> int:
    """Lane-dense N tile; >=2 N blocks when possible (v7x two-TC split)."""
    n128 = -(-n_classes // 128)
    if n128 <= 1:
        return n_classes                      # small head: single full-extent block
    tn = min((tn_pref // 128) * 128, 128 * ((n128 + 1) // 2))
    return max(tn, 128)


def _select_tk(feat_dim: int, tk_pref: int) -> int:
    """Largest 128-multiple divisor of feat_dim <= tk_pref, else full extent."""
    if feat_dim <= tk_pref:
        return feat_dim
    t = (tk_pref // 128) * 128
    while t >= 128:
        if feat_dim % t == 0:
            return t
        t -= 128
    return feat_dim                            # no aligned divisor -> single K step


# ----------------------------------------------------------------------------- wrapper

def prototypes_forward(x: jax.Array, weights: jax.Array, task_id,
                       *, tn_pref: int = 256, tk_pref: int = 1024) -> jax.Array:
    """x: (B, feat_dim), weights: (n_tasks, n_classes, feat_dim), task_id: int."""
    B, feat_dim = x.shape
    n_tasks, n_classes, fd = weights.shape
    assert fd == feat_dim

    out_dtype = x.dtype
    if x.dtype != weights.dtype:
        # Keep the big weight stream at its narrow storage width (bf16/fp8);
        # cast the small operand instead of upcasting every weight tile.
        x = x.astype(weights.dtype)

    tn = _select_tn(n_classes, tn_pref)
    tk = _select_tk(feat_dim, tk_pref)
    n_n = pl.cdiv(n_classes, tn)
    n_k = feat_dim // tk if tk < feat_dim else 1   # exact: tk divides feat_dim
    multi_k = n_k > 1

    # Clamp so an out-of-range task_id cannot become an OOB weight DMA.
    task = jnp.clip(jnp.asarray(task_id, dtype=jnp.int32), 0, n_tasks - 1).reshape((1,))

    if multi_k:
        grid = (n_n, n_k)                                      # N parallel, K reduction last
        in_specs = [
            # x resident: constant block index -> fetched from HBM exactly once.
            pl.BlockSpec((B, feat_dim), lambda n, k, t: (0, 0)),
            # selected head (task axis squeezed, data-dependent via prefetch), tiled (N, K)
            pl.BlockSpec((pl.Squeezed(), tn, tk), lambda n, k, t: (t[0], n, k)),
        ]
        out_specs = pl.BlockSpec((B, tn), lambda n, k, t: (0, n))   # resident across K
        scratch = [pltpu.VMEM((B, tn), jnp.float32)]
        kernel = _make_multi_k_kernel(tk)
        dim_sem = ("parallel", "arbitrary")
    else:
        grid = (n_n,)
        in_specs = [
            pl.BlockSpec((B, feat_dim), lambda n, t: (0, 0)),
            pl.BlockSpec((pl.Squeezed(), tn, feat_dim), lambda n, t: (t[0], n, 0)),
        ]
        out_specs = pl.BlockSpec((B, tn), lambda n, t: (0, n))
        scratch = []
        kernel = _proto_kernel_single_k
        dim_sem = ("parallel",)

    grid_spec = pltpu.PrefetchScalarGridSpec(
        num_scalar_prefetch=1,
        grid=grid,
        in_specs=in_specs,
        out_specs=out_specs,
        scratch_shapes=scratch,
    )

    xi = jnp.dtype(x.dtype).itemsize
    wi = jnp.dtype(weights.dtype).itemsize
    oi = jnp.dtype(out_dtype).itemsize

    # Honest traffic: x once (resident), one head streamed once, output once.
    bytes_accessed = B * feat_dim * xi + n_classes * feat_dim * wi + B * n_classes * oi
    cost = pl.CostEstimate(
        flops=2 * B * n_classes * feat_dim,
        transcendentals=0,
        bytes_accessed=bytes_accessed,
    )

    # VMEM footprint: resident x + double-buffered weight tile + double-buffered
    # output tile + f32 accumulator. Floor at 32 MiB, cap with v7x headroom.
    footprint = (B * feat_dim * xi
                 + 2 * tn * tk * wi
                 + 2 * B * tn * oi
                 + (B * tn * 4 if multi_k else 0))
    vmem_limit = min(max(int(footprint * 1.5) + (2 << 20), 32 << 20), 48 << 20)

    return pl.pallas_call(
        kernel,
        out_shape=jax.ShapeDtypeStruct((B, n_classes), out_dtype),
        grid_spec=grid_spec,
        compiler_params=pltpu.CompilerParams(
            dimension_semantics=dim_sem,
            vmem_limit_bytes=vmem_limit,
        ),
        cost_estimate=cost,
    )(task, x, weights)


# ----------------------------------------------------------------------------- demo

if __name__ == "__main__":
    # Module hyperparameters (small, consistent with the forward pass).
    feat_dim = 32
    n_classes_per_task = 16
    n_tasks = 3
    batch = 8

    key = jax.random.PRNGKey(0)
    kx, kw, kx2, kw2 = jax.random.split(key, 4)

    # Deterministic synthetic parameters: stack of per-task Linear weights,
    # each (n_classes, feat_dim), matching nn.Linear's weight shape.
    bound = 1.0 / jnp.sqrt(feat_dim)
    weights = jax.random.uniform(
        kw, (n_tasks, n_classes_per_task, feat_dim),
        minval=-bound, maxval=bound, dtype=jnp.float32,
    )
    x = jax.random.normal(kx, (batch, feat_dim), dtype=jnp.float32)

    task_id = 1
    out = jax.block_until_ready(prototypes_forward(x, weights, task_id))
    ref = x @ weights[task_id].T
    assert out.shape == (batch, n_classes_per_task)
    assert jnp.allclose(out, ref, atol=1e-5, rtol=1e-5)

    # Second (still small) config exercising the tiled-N / multi-K accumulator path.
    fd2, nc2 = 256, 256
    w2 = jax.random.uniform(kw2, (n_tasks, nc2, fd2), minval=-1.0 / 16, maxval=1.0 / 16,
                            dtype=jnp.float32)
    x2 = jax.random.normal(kx2, (batch, fd2), dtype=jnp.float32)
    out2 = jax.block_until_ready(prototypes_forward(x2, w2, 2, tn_pref=128, tk_pref=128))
    ref2 = jnp.dot(x2, w2[2].T, precision=lax.Precision.HIGHEST)
    assert out2.shape == (batch, nc2)
    assert jnp.allclose(out2, ref2, atol=1e-2, rtol=1e-2)

    print("KERNEL_OK")
</pallas_src>

<mosaic_0001>
module attributes {stable_mosaic.version = 11 : i64} {
  func.func @_proto_kernel_single_k(%arg0: i32, %arg1: memref<1xi32, #tpu.memory_space<smem>>, %arg2: memref<8x32xf32, #tpu.memory_space<vmem>>, %arg3: memref<1x16x32xf32, #tpu.memory_space<vmem>>, %arg4: memref<8x16xf32, #tpu.memory_space<vmem>>) attributes {dimension_semantics = [#tpu.dimension_semantics<parallel>], iteration_bounds = array<i64: 1>, scalar_prefetch = 1 : i64, scratch_operands = 0 : i64, tpu.core_type = #tpu.core_type<tc>, window_params = [{pipeline_mode = #tpu.pipeline_mode<synchronous>, transform_indices = @transform_0, window_bounds = array<i64: 8, 32>}, {transform_indices = @transform_1, window_bounds = array<i64: 1, 16, 32>}, {transform_indices = @transform_2, window_bounds = array<i64: 8, 16>}]} {
    %c0 = arith.constant 0 : index
    %c0_0 = arith.constant 0 : index
    %0 = vector.load %arg2[%c0, %c0_0] : memref<8x32xf32, #tpu.memory_space<vmem>>, vector<8x32xf32>
    %c0_1 = arith.constant 0 : index
    %c0_2 = arith.constant 0 : index
    %c0_3 = arith.constant 0 : index
    %1 = vector.load %arg3[%c0_1, %c0_2, %c0_3] : memref<1x16x32xf32, #tpu.memory_space<vmem>>, vector<1x16x32xf32>
    %2 = vector.shape_cast %1 : vector<1x16x32xf32> to vector<16x32xf32>
    %cst = arith.constant dense<0.000000e+00> : vector<8x16xf32>
    %3 = tpu.matmul %0, %2, %cst {dimension_numbers = #tpu.dot_dimension_numbers<[1], [1], [0], [0], [0, 0, 1, 0], [], []>} : vector<8x32xf32>, vector<16x32xf32>, vector<8x16xf32> -> vector<8x16xf32>
    %c0_4 = arith.constant 0 : index
    %c0_5 = arith.constant 0 : index
    %4 = vector.load %arg4[%c0_4, %c0_5] : memref<8x16xf32, #tpu.memory_space<vmem>>, vector<8x16xf32>
    tpu.vector_store %arg4[%c0_4, %c0_5], %3 {strides = array<i32>} : memref<8x16xf32, #tpu.memory_space<vmem>>, vector<8x16xf32>,
    return
  }
  func.func @transform_0(%arg0: i32, %arg1: memref<1xi32, #tpu.memory_space<smem>>) -> (i32, i32) {
    %c0_i32 = arith.constant 0 : i32
    %c0_i32_0 = arith.constant 0 : i32
    %c0_i32_1 = arith.constant 0 : i32
    return %c0_i32, %c0_i32_0 : i32, i32
  }
  func.func @transform_1(%arg0: i32, %arg1: memref<1xi32, #tpu.memory_space<smem>>) -> (i32, i32, i32) {
    %c0 = arith.constant 0 : index
    %0 = memref.load %arg1[%c0] : memref<1xi32, #tpu.memory_space<smem>>
    %c0_i32 = arith.constant 0 : i32
    %c0_i32_0 = arith.constant 0 : i32
    return %0, %arg0, %c0_i32 : i32, i32, i32
  }
  func.func @transform_2(%arg0: i32, %arg1: memref<1xi32, #tpu.memory_space<smem>>) -> (i32, i32) {
    %c0_i32 = arith.constant 0 : i32
    %c0_i32_0 = arith.constant 0 : i32
    return %c0_i32, %arg0 : i32, i32
  }
}

</mosaic_0001>

<llo_original>
// kernel: tpu_custom_call.1
$region0: #{tpu_custom_call.1}
  #allocation0 [shape = 'u32[]', space=smem, size = 0x4, offset = 0x4, fixed_abs, tag = 'smem constant byte address 0x4 - core index']
  #allocation1 [shape = 'u32[72,128]{1,0:T(1,128)}', space=vmem, size = 0x9000, scoped, tag = 'internal scratch']
  #allocation2 [shape = 's32[1]{0}', space=sflag, size = 0x4, scoped, tag = 'scoped memory for tpu_custom_call.1']
  #allocation3 [shape = 's32[1]{0:T(128)S(6)}', space=smem, size = 0x200, scoped, tag = 'prefetched SMEM operand 0']
  %s0 = inlined_call_operand.<no memory space> [shape: s32[1], index: 0, kind: input, shape index: {}]
  %s1 = inlined_call_operand.hbm [shape: f32[8,32], index: 1, kind: input, shape index: {}]
  %s2 = inlined_call_operand.hbm [shape: f32[3,16,32], index: 2, kind: input, shape index: {}]
  %s3 = inlined_call_operand.hbm [shape: f32[8,16], index: 3, kind: output, shape index: {}]
  %s4 = sld [smem:[#allocation0]]
  $region26: #{tpu_custom_call.1} parent=0
    _
  %s6 = ssub.s32 1, %s4
  %s7 = scalar_select 0, %s6, %s4
  %8 = sst [smem:[#allocation3]] %s0
  $region1: #{tpu_custom_call.1} parent=0
    #allocation4 [shape = 'u8[4096]{0}', space=vmem, size = 0x1000, scoped, tag = 'input window, operand 1, single buffered']
    #allocation5 [shape = 's32[1]{0}', space=sflag, size = 0x4, scoped, tag = 'scoped memory for tpu_custom_call.1']
    #allocation6 [shape = 's32[1]{0}', space=sflag, size = 0x4, scoped, tag = 'scoped memory for tpu_custom_call.1']
    #allocation7 [shape = 'u8[8192]{0}', space=vmem, size = 0x2000, scoped, tag = 'input window, operand 2, single buffered']
    #allocation8 [shape = 's32[1]{0}', space=sflag, size = 0x4, scoped, tag = 'scoped memory for tpu_custom_call.1']
    #allocation9 [shape = 'u8[4096]{0}', space=vmem, size = 0x1000, scoped, tag = 'output window, operand 0, single buffered']
    %9 = vsyncpa [#allocation5], 0
    %10 = vsyncpa [#allocation8], 0
    %11 = vsyncpa [#allocation6], 0
    // Predicated region
    $region2: #{tpu_custom_call.1} parent=1 // pred_check
      _
    $region3: #{tpu_custom_call.1} parent=1 // pred_check_branch
      %13 = sbr.rel (0) target = $region5
    $region4: #{tpu_custom_call.1} parent=1 // pred_region
      %15 = vsyncadd [#allocation5], 0
      %s17 = sshll.u32 %s1, 4
      %s18 = int_to_ptr.hbm [resolvable:$true] %s17
      %s19 = sshll.u32 [#allocation4], 4
      %s20 = int_to_ptr.vmem [resolvable:$true] %s19
      %22 = dma.hbm_to_vmem [thread:$0]  %s18, 128, %s20, [#allocation5]
    $region5: #{tpu_custom_call.1} parent=1 // pred_fallthru
      _
    // Predicated region
    $region6: #{tpu_custom_call.1} parent=1 // pred_check
      _
    $region7: #{tpu_custom_call.1} parent=1 // pred_check_branch
      %24 = sbr.rel (0) target = $region9
    $region8: #{tpu_custom_call.1} parent=1 // pred_region
      %s25 = sld [smem:[#allocation3]]
      %27 = vsyncadd [#allocation8], 0
      %s28 = smul.addr %s25, 2
      %s29 = smul.addr %s28, 8
      %s30 = scalar_lea.hbm %s2, %s29
      %s31 = sshll.u32 %s30, 4
      %s32 = int_to_ptr.hbm [resolvable:$true] %s31
      %s33 = sshll.u32 [#allocation7], 4
      %s34 = int_to_ptr.vmem [resolvable:$true] %s33
      %39 = dma.hbm_to_vmem [thread:$0]  %s32, 256, %s34, [#allocation8], 128, 128, 8
    $region9: #{tpu_custom_call.1} parent=1 // pred_fallthru
      _
    // Predicated region
    $region10: #{tpu_custom_call.1} parent=1 // pred_check
      _
    $region11: #{tpu_custom_call.1} parent=1 // pred_check_branch
      %41 = sbr.rel (0) target = $region13
    $region12: #{tpu_custom_call.1} parent=1 // pred_region
      %43 = dma.done [#allocation5], 128
    $region13: #{tpu_custom_call.1} parent=1 // pred_fallthru
      _
    // Predicated region
    $region14: #{tpu_custom_call.1} parent=1 // pred_check
      _
    $region15: #{tpu_custom_call.1} parent=1 // pred_check_branch
      %45 = sbr.rel (0) target = $region17
    $region16: #{tpu_custom_call.1} parent=1 // pred_region
      %47 = dma.done [#allocation8], 256
    $region17: #{tpu_custom_call.1} parent=1 // pred_fallthru
      _
    %s48 = sld [smem:[#allocation3]]
    %v49 = vld [vmem:[#allocation4] sm:$0xff]
    %v50 = vld [vmem:[#allocation7] sm:$0xff]
    %v51 = vld [vmem:[#allocation7 + $0x8] sm:$0xff]
    %vm52 = vcmask 261120
    %v54 = vsel %vm52, %v49, 0
    %v57 = vsel %vm52, %v50, 0
    %v60 = vsel %vm52, %v51, 0
    %62 = vmatpush.xpose.msra.mxu0 0.0
    %63 = vmatpush.xpose.msra.mxu0 0.0
    %64 = vmatpush.xpose.msra.mxu0 0.0
    %65 = vmatpush.xpose.msra.mxu0 0.0
    %66 = vmatpush.xpose.msra.mxu0 0.0
    %67 = vmatpush.xpose.msra.mxu0 0.0
    %68 = vmatpush.xpose.msra.mxu0 0.0
    %69 = vmatpush.xpose.msra.mxu0 0.0
    %70 = vmatpush.xpose.msra.mxu0 0.0
    %71 = vmatpush.xpose.msra.mxu0 0.0
    %72 = vmatpush.xpose.msra.mxu0 0.0
    %73 = vmatpush.xpose.msra.mxu0 0.0
    %74 = vmatpush.xpose.msra.mxu0 0.0
    %75 = vmatpush.xpose.msra.mxu0 0.0
    %76 = vmatpush.xpose.msra.mxu0 %v60
    %77 = vmatpush.xpose.msra.mxu0 %v57
    %78 = vmatmul.f32.gmra.mxu0 %v54
    %v79 = vpop.f32.mrf.mxu0
    %v80 = vadd.f32 0.0, %v79
    %81 = vdwg.mxu0
    %vm82 = vcmask 130048
    %83 = vst.msk [vmem:[#allocation9] sm:$0xff] %vm82, %v80
    // Predicated region
    $region18: #{tpu_custom_call.1} parent=1 // pred_check
      _
    $region19: #{tpu_custom_call.1} parent=1 // pred_check_branch
      %85 = sbr.rel (0) target = $region21
    $region20: #{tpu_custom_call.1} parent=1 // pred_region
      %87 = vsyncadd [#allocation6], 0
      %s89 = sshll.u32 [#allocation9], 4
      %s90 = int_to_ptr.vmem [resolvable:$true] %s89
      %s91 = sshll.u32 %s3, 4
      %s92 = int_to_ptr.hbm [resolvable:$true] %s91
      %94 = dma.vmem_to_hbm [thread:$0]  %s90, 128, %s92, [#allocation6]
    $region21: #{tpu_custom_call.1} parent=1 // pred_fallthru
      _
    // Predicated region
    $region22: #{tpu_custom_call.1} parent=1 // pred_check
      _
    $region23: #{tpu_custom_call.1} parent=1 // pred_check_branch
      %96 = sbr.rel (0) target = $region25
    $region24: #{tpu_custom_call.1} parent=1 // pred_region
      %98 = dma.done [#allocation6], 128
    $region25: #{tpu_custom_call.1} parent=1 // pred_fallthru
      _
    %99 = vsyncpa [#allocation5], 1
    %100 = vsyncpa [#allocation8], 1
    %101 = vsyncpa [#allocation6], 1

</llo_original>
